<compile_context>
chip_gen: v5e
topology: v5e:2x2
jax: 0.10.0
libtpu: 0.0.40
codegen_flags: <defaults>
</compile_context>

<pallas_src>
import functools

import jax
import jax.numpy as jnp
from jax.experimental import pallas as pl
from jax.experimental.pallas import tpu as pltpu


# ----------------------------- sizing helpers ------------------------------

def _cdiv(a, b):
    return -(-a // b)


def _sublane_pack(itemsize):
    # Sublane packing of a vreg: 8 rows f32, 16 bf16/f16, 32 int8/fp8.
    return max(8, 32 // max(1, itemsize))


def _lane_pad(cols):
    return _cdiv(cols, 128) * 128


def _hw_budgets():
    """(target_tile_bytes, vmem_limit_bytes, fused_budget_bytes), generation-aware."""
    mib = 1024 * 1024
    vmem_cap = None
    try:
        vmem_cap = getattr(pltpu.get_tpu_info(), "vmem_capacity_bytes", None)
    except Exception:  # no device / older API -> conservative defaults
        vmem_cap = None
    if vmem_cap is not None and vmem_cap >= 100 * mib:   # v5e / v6e: 128 MiB physical
        return 4 * mib, 64 * mib, 40 * mib
    if vmem_cap is not None:                             # v7x-class: 64 MiB physical
        return 2 * mib, 40 * mib, 16 * mib
    return 2 * mib, 32 * mib, 12 * mib                   # unknown: conservative


def _pick_tiles(rows, cols, itemsize, target_bytes):
    """Padding-aware (row_tile, col_tile) so one VMEM block stays near target_bytes."""
    pack = _sublane_pack(itemsize)

    # Lane-axis (column) tiling only when even a minimum-height slab of the
    # full width exceeds the budget (very large H*W).
    if pack * _lane_pad(cols) * itemsize > target_bytes:
        col_tile = max(128, (target_bytes // (pack * itemsize) // 128) * 128)
    else:
        col_tile = cols

    bytes_per_row = _lane_pad(min(col_tile, cols)) * itemsize
    row_tile = max(pack, (target_bytes // bytes_per_row // pack) * pack)
    row_tile = min(row_tile, rows)

    # v7x megacore: avoid a single-step grid when the rows can be split.
    if col_tile >= cols and row_tile >= rows and rows >= 2 * pack:
        half = _cdiv(_cdiv(rows, 2), pack) * pack
        row_tile = half if half < rows else max(pack, (rows // 2) // pack * pack)
    return row_tile, col_tile


# --------------------------------- kernels ---------------------------------

def _fused_bn_kernel(x_ref, gamma_ref, beta_ref, smean_ref, svar_ref, o_ref, *,
                     estimate_mean, estimate_var, inv_n, inv_nm1, eps):
    """Whole-activation-resident BN: stats + normalize with a single HBM read of x."""
    x = x_ref[...].astype(jnp.float32)                               # (N, C, L)
    if estimate_mean or estimate_var:
        row_sum = jnp.sum(x, axis=2, keepdims=True)                  # (N, C, 1) lane reduce
        mean_b = jnp.sum(row_sum, axis=0, keepdims=True) * inv_n     # (1, C, 1)
    if estimate_var:
        d = x - mean_b
        m2 = jnp.sum(jnp.sum(d * d, axis=2, keepdims=True), axis=0, keepdims=True)
        var_b = m2 * inv_nm1                                         # unbiased batch var
    mean = mean_b if estimate_mean else smean_ref[...][None]         # (1, C, 1)
    var = var_b if estimate_var else svar_ref[...][None]
    inv_std = jax.lax.rsqrt(var + eps)
    scale = gamma_ref[...][None] * inv_std
    shift = beta_ref[...][None] - mean * scale
    o_ref[...] = (x * scale + shift).astype(o_ref.dtype)


def _row_stats_kernel(x_ref, stats_ref, *, inv_cols):
    """Per-row mean and centered sum-of-squares: stats[:, 0]=mean, stats[:, 1]=m2."""
    x = x_ref[...].astype(jnp.float32)
    m = jnp.sum(x, axis=1, keepdims=True) * inv_cols                 # XLU lane reduce
    d = x - m
    stats_ref[:, 0:1] = m
    stats_ref[:, 1:2] = jnp.sum(d * d, axis=1, keepdims=True)


def _row_sums_kernel(x_ref, acc_ref, *, n_cols, col_tile):
    """Per-row [sum, sumsq] accumulated across the (arbitrary) column grid axis."""
    j = pl.program_id(1)

    @pl.when(j == 0)
    def _():
        acc_ref[...] = jnp.zeros_like(acc_ref)

    x = x_ref[...].astype(jnp.float32)
    lane = jax.lax.broadcasted_iota(jnp.int32, x.shape, 1)
    x = jnp.where(j * col_tile + lane < n_cols, x, 0.0)              # mask ragged block
    acc_ref[:, 0:1] += jnp.sum(x, axis=1, keepdims=True)
    acc_ref[:, 1:2] += jnp.sum(x * x, axis=1, keepdims=True)


def _normalize_kernel(x_ref, ss_ref, o_ref):
    """y = x * scale + shift; per-row fused [scale, shift] broadcast over lanes."""
    x = x_ref[...].astype(jnp.float32)
    o_ref[...] = (x * ss_ref[:, 0:1] + ss_ref[:, 1:2]).astype(o_ref.dtype)


# --------------------------------- wrapper ---------------------------------

def partly_adaptive_bn(x_nchw, weight, bias, source_mean, source_var, *,
                       eps=1e-5, estimate_mean=True, estimate_var=True,
                       target_tile_bytes=None, vmem_limit_bytes=None,
                       max_fused_bytes=None):
    N, C, H, W = x_nchw.shape
    R, L = N * C, H * W
    n_elems = N * H * W                          # per-channel reduction count
    itemsize = jnp.dtype(x_nchw.dtype).itemsize

    tgt, vlim, fused_budget = _hw_budgets()
    if target_tile_bytes is not None:
        tgt = target_tile_bytes
    if vmem_limit_bytes is not None:
        vlim = vmem_limit_bytes
    if max_fused_bytes is not None:
        fused_budget = max_fused_bytes

    need_stats = estimate_mean or estimate_var
    inv_nm1 = 1.0 / max(n_elems - 1, 1)          # unbiased (PyTorch momentum=1.0 buffer)

    gamma = weight.astype(jnp.float32).reshape(C, 1)
    beta = bias.astype(jnp.float32).reshape(C, 1)
    smean = source_mean.astype(jnp.float32).reshape(C, 1)
    svar = source_var.astype(jnp.float32).reshape(C, 1)

    # -------- Path 1: fused single pass (activation resident in VMEM) --------
    if need_stats:
        pack = _sublane_pack(itemsize)
        xio = N * _cdiv(C, pack) * pack * _lane_pad(L) * itemsize    # padded in (=out) block
        f32_work = N * _cdiv(C, 8) * 8 * _lane_pad(L) * 4            # in-kernel f32 copy
        # Conservative: double-buffered input + output blocks plus the f32 working copy.
        if 4 * xio + f32_work <= fused_budget:
            x3d = x_nchw.reshape(N, C, L)
            y3d = pl.pallas_call(
                functools.partial(
                    _fused_bn_kernel,
                    estimate_mean=estimate_mean, estimate_var=estimate_var,
                    inv_n=1.0 / n_elems, inv_nm1=inv_nm1, eps=float(eps)),
                out_shape=jax.ShapeDtypeStruct((N, C, L), x_nchw.dtype),
                grid_spec=pltpu.PrefetchScalarGridSpec(
                    num_scalar_prefetch=0,
                    grid=(1,),
                    in_specs=[
                        pl.BlockSpec((N, C, L), lambda i: (0, 0, 0)),
                        pl.BlockSpec((C, 1), lambda i: (0, 0)),
                        pl.BlockSpec((C, 1), lambda i: (0, 0)),
                        pl.BlockSpec((C, 1), lambda i: (0, 0)),
                        pl.BlockSpec((C, 1), lambda i: (0, 0)),
                    ],
                    out_specs=pl.BlockSpec((N, C, L), lambda i: (0, 0, 0)),
                ),
                compiler_params=pltpu.CompilerParams(
                    dimension_semantics=("arbitrary",),
                    vmem_limit_bytes=vlim),
            )(x3d, gamma, beta, smean, svar)
            return y3d.reshape(N, C, H, W)

    # -------- Path 2: streamed two-pass over the (N*C, H*W) view --------
    x2d = x_nchw.reshape(R, L)
    row_tile, col_tile = _pick_tiles(R, L, itemsize, tgt)
    nrb = _cdiv(R, row_tile)
    ncb = _cdiv(L, col_tile) if col_tile < L else 1

    if need_stats:
        if ncb == 1:
            # Common case: one lane sweep per row, centered (stable) per-row stats.
            stats = pl.pallas_call(
                functools.partial(_row_stats_kernel, inv_cols=1.0 / L),
                out_shape=jax.ShapeDtypeStruct((R, 2), jnp.float32),
                grid_spec=pltpu.PrefetchScalarGridSpec(
                    num_scalar_prefetch=0,
                    grid=(nrb,),
                    in_specs=[pl.BlockSpec((row_tile, L), lambda i: (i, 0))],
                    out_specs=pl.BlockSpec((row_tile, 2), lambda i: (i, 0)),
                ),
                compiler_params=pltpu.CompilerParams(
                    dimension_semantics=("parallel",),
                    vmem_limit_bytes=vlim),
            )(x2d)
            row_mean = stats[:, 0].reshape(N, C)
            row_m2 = stats[:, 1].reshape(N, C)
            # Tiny (N, C) combine in XLA: numerically stable parallel-variance merge.
            batch_mean = jnp.mean(row_mean, axis=0)
            batch_m2 = jnp.sum(row_m2, axis=0) + jnp.float32(L) * jnp.sum(
                (row_mean - batch_mean[None, :]) ** 2, axis=0)
        else:
            # Huge H*W: lane-tiled, accumulate per-row [sum, sumsq] across column tiles.
            sums = pl.pallas_call(
                functools.partial(_row_sums_kernel, n_cols=L, col_tile=col_tile),
                out_shape=jax.ShapeDtypeStruct((R, 2), jnp.float32),
                grid_spec=pltpu.PrefetchScalarGridSpec(
                    num_scalar_prefetch=0,
                    grid=(nrb, ncb),
                    in_specs=[pl.BlockSpec((row_tile, col_tile), lambda i, j: (i, j))],
                    out_specs=pl.BlockSpec((row_tile, 2), lambda i, j: (i, 0)),
                ),
                compiler_params=pltpu.CompilerParams(
                    dimension_semantics=("parallel", "arbitrary"),
                    vmem_limit_bytes=vlim),
            )(x2d)
            tot = jnp.sum(sums[:, 0].reshape(N, C), axis=0)
            tot_sq = jnp.sum(sums[:, 1].reshape(N, C), axis=0)
            batch_mean = tot / jnp.float32(n_elems)
            batch_m2 = tot_sq - jnp.float32(n_elems) * batch_mean * batch_mean
        batch_var = jnp.maximum(batch_m2 * jnp.float32(inv_nm1), 0.0)
    else:
        batch_mean = None
        batch_var = None

    mean_c = batch_mean if estimate_mean else smean[:, 0]
    var_c = batch_var if estimate_var else svar[:, 0]

    # Fold mean/var/gamma/beta once into a fused per-row [scale, shift] pair.
    inv_std = jax.lax.rsqrt(var_c + jnp.float32(eps))
    scale_c = gamma[:, 0] * inv_std
    shift_c = beta[:, 0] - mean_c * scale_c
    ss_rows = jnp.stack([jnp.tile(scale_c, N), jnp.tile(shift_c, N)], axis=1)  # (R, 2)

    y2d = pl.pallas_call(
        _normalize_kernel,
        out_shape=jax.ShapeDtypeStruct((R, L), x_nchw.dtype),
        grid_spec=pltpu.PrefetchScalarGridSpec(
            num_scalar_prefetch=0,
            grid=(nrb, ncb),
            in_specs=[
                pl.BlockSpec((row_tile, col_tile), lambda i, j: (i, j)),
                pl.BlockSpec((row_tile, 2), lambda i, j: (i, 0)),
            ],
            out_specs=pl.BlockSpec((row_tile, col_tile), lambda i, j: (i, j)),
        ),
        compiler_params=pltpu.CompilerParams(
            dimension_semantics=("parallel", "parallel"),
            vmem_limit_bytes=vlim),
    )(x2d, ss_rows)
    return y2d.reshape(N, C, H, W)


# ---------------------------------- test -----------------------------------

def _reference(x, w, b, sm, sv, eps, estimate_mean, estimate_var):
    m = jnp.mean(x, axis=(0, 2, 3))
    v = jnp.var(x, axis=(0, 2, 3), ddof=1)   # unbiased, matches momentum=1.0 buffer
    mean = (m if estimate_mean else sm)[None, :, None, None]
    var = (v if estimate_var else sv)[None, :, None, None]
    return (x - mean) / jnp.sqrt(var + eps) * w[None, :, None, None] + b[None, :, None, None]


def _make_inputs(key, shape):
    kx, kw, kb, km, kv = jax.random.split(key, 5)
    _, C, _, _ = shape
    x = jax.random.normal(kx, shape, dtype=jnp.float32) * 2.0 + 0.5
    w = jax.random.normal(kw, (C,), dtype=jnp.float32) * 0.1 + 1.0
    b = jax.random.normal(kb, (C,), dtype=jnp.float32) * 0.1
    sm = jax.random.normal(km, (C,), dtype=jnp.float32) * 0.3
    sv = jax.nn.softplus(jax.random.normal(kv, (C,), dtype=jnp.float32)) + 0.5
    return x, w, b, sm, sv


if __name__ == "__main__":
    eps = 1e-5   # nn.BatchNorm2d default
    key = jax.random.PRNGKey(0)
    k1, k2 = jax.random.split(key)

    cases = [
        # (shape, kwargs, key) -- kwargs force specific code paths at small sizes.
        ((2, 4, 16, 16), {}, k1),                                    # fused single-pass
        ((2, 4, 16, 16), dict(max_fused_bytes=0), k1),               # streamed, 1 col block
        ((2, 8, 18, 18), dict(max_fused_bytes=0,                     # streamed, lane-tiled
                              target_tile_bytes=4096), k2),          #   ragged last block
    ]
    for shape, kw, k in cases:
        x, w, b, sm, sv = _make_inputs(k, shape)
        for est_m, est_v in [(True, True), (True, False), (False, True), (False, False)]:
            out = partly_adaptive_bn(x, w, b, sm, sv, eps=eps,
                                     estimate_mean=est_m, estimate_var=est_v, **kw)
            out = jax.block_until_ready(out)
            ref = _reference(x, w, b, sm, sv, eps, est_m, est_v)
            if not jnp.allclose(out, ref, atol=1e-4, rtol=1e-4):
                raise AssertionError(
                    f"mismatch shape={shape} kwargs={kw} "
                    f"(estimate_mean={est_m}, estimate_var={est_v}): "
                    f"max err {jnp.max(jnp.abs(out - ref))}")
    print("KERNEL_OK")
</pallas_src>

<mosaic_0001>
module attributes {stable_mosaic.version = 11 : i64} {
  func.func @_fused_bn_kernel(%arg0: i32, %arg1: memref<2x4x256xf32, #tpu.memory_space<vmem>>, %arg2: memref<4x1xf32, #tpu.memory_space<vmem>>, %arg3: memref<4x1xf32, #tpu.memory_space<vmem>>, %arg4: memref<4x1xf32, #tpu.memory_space<vmem>>, %arg5: memref<4x1xf32, #tpu.memory_space<vmem>>, %arg6: memref<2x4x256xf32, #tpu.memory_space<vmem>>) attributes {dimension_semantics = [#tpu.dimension_semantics<arbitrary>], iteration_bounds = array<i64: 1>, scalar_prefetch = 0 : i64, scratch_operands = 0 : i64, tpu.core_type = #tpu.core_type<tc>, window_params = [{pipeline_mode = #tpu.pipeline_mode<synchronous>, transform_indices = @transform_0, window_bounds = array<i64: 2, 4, 256>}, {pipeline_mode = #tpu.pipeline_mode<synchronous>, transform_indices = @transform_1, window_bounds = array<i64: 4, 1>}, {pipeline_mode = #tpu.pipeline_mode<synchronous>, transform_indices = @transform_2, window_bounds = array<i64: 4, 1>}, {pipeline_mode = #tpu.pipeline_mode<synchronous>, transform_indices = @transform_3, window_bounds = array<i64: 4, 1>}, {pipeline_mode = #tpu.pipeline_mode<synchronous>, transform_indices = @transform_4, window_bounds = array<i64: 4, 1>}, {pipeline_mode = #tpu.pipeline_mode<synchronous>, transform_indices = @transform_5, window_bounds = array<i64: 2, 4, 256>}]} {
    %c0 = arith.constant 0 : index
    %c0_0 = arith.constant 0 : index
    %c0_1 = arith.constant 0 : index
    %0 = vector.load %arg1[%c0, %c0_0, %c0_1] : memref<2x4x256xf32, #tpu.memory_space<vmem>>, vector<2x4x256xf32>
    %cst = arith.constant dense<0.000000e+00> : vector<2x4xf32>
    %1 = vector.multi_reduction <add>, %0, %cst [2] : vector<2x4x256xf32> to vector<2x4xf32>
    %2 = vector.shape_cast %1 : vector<2x4xf32> to vector<2x4x1xf32>
    %cst_2 = arith.constant dense<0.000000e+00> : vector<4x1xf32>
    %3 = vector.multi_reduction <add>, %2, %cst_2 [0] : vector<2x4x1xf32> to vector<4x1xf32>
    %4 = vector.shape_cast %3 : vector<4x1xf32> to vector<1x4x1xf32>
    %cst_3 = arith.constant 0.001953125 : f32
    %5 = vector.broadcast %cst_3 : f32 to vector<1x4x1xf32>
    %6 = arith.mulf %4, %5 : vector<1x4x1xf32>
    %7 = vector.broadcast %6 : vector<1x4x1xf32> to vector<2x4x256xf32>
    %8 = arith.subf %0, %7 : vector<2x4x256xf32>
    %9 = arith.mulf %8, %8 : vector<2x4x256xf32>
    %cst_4 = arith.constant dense<0.000000e+00> : vector<2x4xf32>
    %10 = vector.multi_reduction <add>, %9, %cst_4 [2] : vector<2x4x256xf32> to vector<2x4xf32>
    %11 = vector.shape_cast %10 : vector<2x4xf32> to vector<2x4x1xf32>
    %cst_5 = arith.constant dense<0.000000e+00> : vector<4x1xf32>
    %12 = vector.multi_reduction <add>, %11, %cst_5 [0] : vector<2x4x1xf32> to vector<4x1xf32>
    %13 = vector.shape_cast %12 : vector<4x1xf32> to vector<1x4x1xf32>
    %cst_6 = arith.constant 0.00195694715 : f32
    %14 = vector.broadcast %cst_6 : f32 to vector<1x4x1xf32>
    %15 = arith.mulf %13, %14 : vector<1x4x1xf32>
    %cst_7 = arith.constant 9.99999974E-6 : f32
    %16 = vector.broadcast %cst_7 : f32 to vector<1x4x1xf32>
    %17 = arith.addf %15, %16 : vector<1x4x1xf32>
    %18 = math.rsqrt %17 : vector<1x4x1xf32>
    %c0_8 = arith.constant 0 : index
    %c0_9 = arith.constant 0 : index
    %19 = vector.load %arg2[%c0_8, %c0_9] : memref<4x1xf32, #tpu.memory_space<vmem>>, vector<4x1xf32>
    %20 = vector.shape_cast %19 : vector<4x1xf32> to vector<1x4x1xf32>
    %21 = arith.mulf %20, %18 : vector<1x4x1xf32>
    %c0_10 = arith.constant 0 : index
    %c0_11 = arith.constant 0 : index
    %22 = vector.load %arg3[%c0_10, %c0_11] : memref<4x1xf32, #tpu.memory_space<vmem>>, vector<4x1xf32>
    %23 = vector.shape_cast %22 : vector<4x1xf32> to vector<1x4x1xf32>
    %24 = arith.mulf %6, %21 : vector<1x4x1xf32>
    %25 = arith.subf %23, %24 : vector<1x4x1xf32>
    %26 = vector.broadcast %21 : vector<1x4x1xf32> to vector<2x4x256xf32>
    %27 = arith.mulf %0, %26 : vector<2x4x256xf32>
    %28 = vector.broadcast %25 : vector<1x4x1xf32> to vector<2x4x256xf32>
    %29 = arith.addf %27, %28 : vector<2x4x256xf32>
    %c0_12 = arith.constant 0 : index
    %c0_13 = arith.constant 0 : index
    %c0_14 = arith.constant 0 : index
    %30 = vector.load %arg6[%c0_12, %c0_13, %c0_14] : memref<2x4x256xf32, #tpu.memory_space<vmem>>, vector<2x4x256xf32>
    tpu.vector_store %arg6[%c0_12, %c0_13, %c0_14], %29 {strides = array<i32>} : memref<2x4x256xf32, #tpu.memory_space<vmem>>, vector<2x4x256xf32>,
    return
  }
  func.func @transform_0(%arg0: i32) -> (i32, i32, i32) {
    %c0_i32 = arith.constant 0 : i32
    %c0_i32_0 = arith.constant 0 : i32
    %c0_i32_1 = arith.constant 0 : i32
    %c0_i32_2 = arith.constant 0 : i32
    return %c0_i32, %c0_i32_0, %c0_i32_1 : i32, i32, i32
  }
  func.func @transform_1(%arg0: i32) -> (i32, i32) {
    %c0_i32 = arith.constant 0 : i32
    %c0_i32_0 = arith.constant 0 : i32
    %c0_i32_1 = arith.constant 0 : i32
    return %c0_i32, %c0_i32_0 : i32, i32
  }
  func.func @transform_2(%arg0: i32) -> (i32, i32) {
    %c0_i32 = arith.constant 0 : i32
    %c0_i32_0 = arith.constant 0 : i32
    %c0_i32_1 = arith.constant 0 : i32
    return %c0_i32, %c0_i32_0 : i32, i32
  }
  func.func @transform_3(%arg0: i32) -> (i32, i32) {
    %c0_i32 = arith.constant 0 : i32
    %c0_i32_0 = arith.constant 0 : i32
    %c0_i32_1 = arith.constant 0 : i32
    return %c0_i32, %c0_i32_0 : i32, i32
  }
  func.func @transform_4(%arg0: i32) -> (i32, i32) {
    %c0_i32 = arith.constant 0 : i32
    %c0_i32_0 = arith.constant 0 : i32
    %c0_i32_1 = arith.constant 0 : i32
    return %c0_i32, %c0_i32_0 : i32, i32
  }
  func.func @transform_5(%arg0: i32) -> (i32, i32, i32) {
    %c0_i32 = arith.constant 0 : i32
    %c0_i32_0 = arith.constant 0 : i32
    %c0_i32_1 = arith.constant 0 : i32
    %c0_i32_2 = arith.constant 0 : i32
    return %c0_i32, %c0_i32_0, %c0_i32_1 : i32, i32, i32
  }
}

</mosaic_0001>

<llo_original>
// kernel: tpu_custom_call.1
$region0: #{tpu_custom_call.1}
  #allocation0 [shape = 'u32[]', space=smem, size = 0x4, offset = 0x4, fixed_abs, tag = 'smem constant byte address 0x4 - core index']
  #allocation1 [shape = 'u32[72,128]{1,0:T(1,128)}', space=vmem, size = 0x9000, scoped, tag = 'internal scratch']
  %s0 = inlined_call_operand.hbm [shape: f32[2,4,256], index: 0, kind: input, shape index: {}]
  %s1 = inlined_call_operand.vmem [shape: f32[4,1], index: 1, kind: input, shape index: {}]
  %s2 = inlined_call_operand.vmem [shape: f32[4,1], index: 2, kind: input, shape index: {}]
  %s3 = inlined_call_operand.vmem [shape: f32[4,1], index: 3, kind: input, shape index: {}]
  %s4 = inlined_call_operand.vmem [shape: f32[4,1], index: 4, kind: input, shape index: {}]
  %s5 = inlined_call_operand.hbm [shape: f32[2,4,256], index: 5, kind: output, shape index: {}]
  %s6 = sld [smem:[#allocation0]]
  $region34: #{tpu_custom_call.1} parent=0
    _
  %s8 = ssub.s32 1, %s6
  %s9 = scalar_select 0, %s8, %s6
  $region1: #{tpu_custom_call.1} parent=0
    #allocation2 [shape = 'u8[8192]{0}', space=vmem, size = 0x2000, scoped, tag = 'input window, operand 0, single buffered']
    #allocation3 [shape = 's32[1]{0}', space=sflag, size = 0x4, scoped, tag = 'scoped memory for tpu_custom_call.1']
    #allocation4 [shape = 's32[1]{0}', space=sflag, size = 0x4, scoped, tag = 'scoped memory for tpu_custom_call.1']
    #allocation5 [shape = 'u8[8192]{0}', space=vmem, size = 0x2000, scoped, tag = 'output window, operand 0, single buffered']
    %10 = vsyncpa [#allocation3], 0
    %11 = vsyncpa [#allocation4], 0
    // Predicated region
    $region2: #{tpu_custom_call.1} parent=1 // pred_check
      _
    $region3: #{tpu_custom_call.1} parent=1 // pred_check_branch
      %13 = sbr.rel (0) target = $region5
    $region4: #{tpu_custom_call.1} parent=1 // pred_region
      %15 = vsyncadd [#allocation3], 0
      %s16 = sshll.u32 %s0, 4
      %s17 = int_to_ptr.hbm [resolvable:$true] %s16
      %s18 = sshll.u32 [#allocation2], 4
      %s19 = int_to_ptr.vmem [resolvable:$true] %s18
      %24 = dma.hbm_to_vmem [thread:$0]  %s17, 256, %s19, [#allocation3], 128, 128, 8
    $region5: #{tpu_custom_call.1} parent=1 // pred_fallthru
      _
    // Predicated region
    $region6: #{tpu_custom_call.1} parent=1 // pred_check
      _
    $region7: #{tpu_custom_call.1} parent=1 // pred_check_branch
      %26 = sbr.rel (0) target = $region9
    $region8: #{tpu_custom_call.1} parent=1 // pred_region
      _
    $region9: #{tpu_custom_call.1} parent=1 // pred_fallthru
      _
    // Predicated region
    $region10: #{tpu_custom_call.1} parent=1 // pred_check
      _
    $region11: #{tpu_custom_call.1} parent=1 // pred_check_branch
      %28 = sbr.rel (0) target = $region13
    $region12: #{tpu_custom_call.1} parent=1 // pred_region
      _
    $region13: #{tpu_custom_call.1} parent=1 // pred_fallthru
      _
    // Predicated region
    $region14: #{tpu_custom_call.1} parent=1 // pred_check
      _
    $region15: #{tpu_custom_call.1} parent=1 // pred_check_branch
      %30 = sbr.rel (0) target = $region17
    $region16: #{tpu_custom_call.1} parent=1 // pred_region
      _
    $region17: #{tpu_custom_call.1} parent=1 // pred_fallthru
      _
    // Predicated region
    $region18: #{tpu_custom_call.1} parent=1 // pred_check
      _
    $region19: #{tpu_custom_call.1} parent=1 // pred_check_branch
      %32 = sbr.rel (0) target = $region21
    $region20: #{tpu_custom_call.1} parent=1 // pred_region
      _
    $region21: #{tpu_custom_call.1} parent=1 // pred_fallthru
      _
    // Predicated region
    $region22: #{tpu_custom_call.1} parent=1 // pred_check
      _
    $region23: #{tpu_custom_call.1} parent=1 // pred_check_branch
      %34 = sbr.rel (0) target = $region25
    $region24: #{tpu_custom_call.1} parent=1 // pred_region
      %36 = dma.done [#allocation3], 256
    $region25: #{tpu_custom_call.1} parent=1 // pred_fallthru
      _
    %v37 = vld [vmem:[#allocation2] sm:$0xff]
    %v38 = vld [vmem:[#allocation2 + $0x8] sm:$0xff]
    %41 = vst [vmem:[#allocation1] ss:$2 sm:$0xff] %v37
    %v42 = vld.sshfl [vmem:[#allocation1] sm:$0xff pattern:$0x75316420]
    %v43 = vld.sshfl [vmem:[#allocation1 + $0x8] sm:$0xff pattern:$0x75316420]
    %s44 = scalar_lea.vmem [#allocation1], 16
    %45 = vst [vmem:[%s44] ss:$2 sm:$0xff] %v38
    %v46 = vld.sshfl [vmem:[#allocation1 + $0x10] sm:$0xff pattern:$0x75316420]
    %v47 = vld.sshfl [vmem:[#allocation1 + $0x18] sm:$0xff pattern:$0x75316420]
    %vm52 = vcmask 1043456
    %v53 = vsel %vm52, %v42, 0.0
    %v54 = vsel %vm52, %v43, 0.0
    %v55 = vadd.f32 %v53, %v54
    %56 = vadd.xlane.f32.xlu0 %v55
    %v57 = vpop.xlane.xlu0 %56
    %v58 = vsel %vm52, %v46, 0.0
    %v59 = vsel %vm52, %v47, 0.0
    %v60 = vadd.f32 %v58, %v59
    %61 = vadd.xlane.f32.xlu0 %v60
    %v62 = vpop.xlane.xlu0 %61
    %v63 = vsel %vm52, %v57, 0.0
    %v64 = vsel %vm52, %v62, 0.0
    %v65 = vadd.f32 %v63, %v64
    %v66 = vmul.f32 %v65, 0.001953125
    %v69 = vunpack.c.l.s4 839922192
    %v70 = vunpack.c.0.s8 %v69
    %v71 = vperm.slane %v66, %v70
    %v73 = vsub.f32 %v37, %v71
    %v74 = vsub.f32 %v38, %v71
    %v75 = vmul.f32 %v73, %v73
    %v76 = vmul.f32 %v74, %v74
    %79 = vst [vmem:[#allocation1] ss:$2 sm:$0xff] %v75
    %v80 = vld.sshfl [vmem:[#allocation1] sm:$0xff pattern:$0x75316420]
    %v81 = vld.sshfl [vmem:[#allocation1 + $0x8] sm:$0xff pattern:$0x75316420]
    %s82 = scalar_lea.vmem [#allocation1], 16
    %83 = vst [vmem:[%s82] ss:$2 sm:$0xff] %v76
    %v84 = vld.sshfl [vmem:[#allocation1 + $0x10] sm:$0xff pattern:$0x75316420]
    %v85 = vld.sshfl [vmem:[#allocation1 + $0x18] sm:$0xff pattern:$0x75316420]
    %v90 = vsel %vm52, %v80, 0.0
    %v91 = vsel %vm52, %v81, 0.0
    %v92 = vadd.f32 %v90, %v91
    %93 = vadd.xlane.f32.xlu0 %v92
    %v94 = vpop.xlane.xlu0 %93
    %v95 = vsel %vm52, %v84, 0.0
    %v96 = vsel %vm52, %v85, 0.0
    %v97 = vadd.f32 %v95, %v96
    %98 = vadd.xlane.f32.xlu0 %v97
    %v99 = vpop.xlane.xlu0 %98
    %v100 = vsel %vm52, %v94, 0.0
    %v101 = vsel %vm52, %v99, 0.0
    %v102 = vadd.f32 %v100, %v101
    %v103 = vmul.f32 %v102, 0.0019569471
    %v104 = vadd.f32 %v103, 1e-05
    %v105 = vrsqrt.pop %v104
    %v106 = vmul.f32 %v105, %v104
    %v107 = vmul.f32 %v106, %v105
    %v108 = vmul.f32 0.5, %v107
    %v109 = vsub.f32 1.5, %v108
    %v110 = vmul.f32 %v105, %v109
    %vm111 = vweird.f32 %v104
    %vm112 = vweird.f32 %v105
    %vm113 = vmor %vm111, %vm112
    %v114 = vsel %vm113, %v105, %v110
    %v115 = vld [vmem:[%s1] sm:$0xf]
    %v116 = vmul.f32 %v115, %v114
    %v117 = vld [vmem:[%s2] sm:$0xf]
    %v118 = vmul.f32 %v66, %v116
    %v119 = vsub.f32 %v117, %v118
    %121 = vset.pattern.permute.xlu0 0
    %122 = vperm.xlu0 %121, %v116
    %v123 = vpop.permute.xlu0 %122
    %v125 = vunpack.c.l.s4 839922192
    %v126 = vunpack.c.0.s8 %v125
    %v127 = vperm.slane %v123, %v126
    %v129 = vmul.f32 %v37, %v127
    %v130 = vmul.f32 %v38, %v127
    %132 = vset.pattern.permute.xlu0 0
    %133 = vperm.xlu0 %132, %v119
    %v134 = vpop.permute.xlu0 %133
    %v136 = vunpack.c.l.s4 839922192
    %v137 = vunpack.c.0.s8 %v136
    %v138 = vperm.slane %v134, %v137
    %v140 = vadd.f32 %v129, %v138
    %v141 = vadd.f32 %v130, %v138
    %142 = vst [vmem:[#allocation5] sm:$0xff] %v140
    %143 = vst [vmem:[#allocation5 + $0x8] sm:$0xff] %v141
    // Predicated region
    $region26: #{tpu_custom_call.1} parent=1 // pred_check
      _
    $region27: #{tpu_custom_call.1} parent=1 // pred_check_branch
      %145 = sbr.rel (0) target = $region29
    $region28: #{tpu_custom_call.1} parent=1 // pred_region
      %147 = vsyncadd [#allocation4], 0
      %s148 = sshll.u32 [#allocation5], 4
      %s149 = int_to_ptr.vmem [resolvable:$true] %s148
      %s150 = sshll.u32 %s5, 4
      %s151 = int_to_ptr.hbm [resolvable:$true] %s150
      %156 = dma.vmem_to_hbm [thread:$0]  %s149, 256, %s151, [#allocation4], 128, 128, 8
    $region29: #{tpu_custom_call.1} parent=1 // pred_fallthru
      _
    // Predicated region
    $region30: #{tpu_custom_call.1} parent=1 // pred_check
      _
    $region31: #{tpu_custom_call.1} parent=1 // pred_check_branch
      %158 = sbr.rel (0) target = $region33
    $region32: #{tpu_custom_call.1} parent=1 // pred_region
      %160 = dma.done [#allocation4], 256
    $region33: #{tpu_custom_call.1} parent=1 // pred_fallthru
      _
    %161 = vsyncpa [#allocation3], 1
    %162 = vsyncpa [#allocation4], 1

</llo_original>
